<compile_context>
chip_gen: v7x
topology: tpu7x:2x2x1
jax: 0.10.0
libtpu: 0.0.40
codegen_flags: <defaults>
</compile_context>

<pallas_src>
import functools

import jax
import jax.numpy as jnp
from jax.experimental import pallas as pl
from jax.experimental.pallas import tpu as pltpu


LANE = 128                         # lane width: pad all last dims to multiples of this
MAX_TILE = 512                     # upper bound for row / reduction tiles (HBM-bound regime)
XW_RESIDENT_BYTES = 4 * 1024 * 1024  # keep XW fully VMEM-resident below this size


def _round_up(n, m):
    return ((n + m - 1) // m) * m


def _pick_tile(n_pad, max_tile=MAX_TILE):
    """Largest tile <= max_tile that divides n_pad (n_pad is a multiple of 128)."""
    for t in (512, 384, 256, 128):
        if t <= max_tile and n_pad % t == 0:
            return t
    return 128


def _pad2(a, rows, cols):
    r, c = a.shape
    return jnp.pad(a, ((0, rows - r), (0, cols - c)))


# ---------------------------------------------------------------------------
# Pallas kernels
# ---------------------------------------------------------------------------
def _make_gcn_kernel(tk, resident_xw):
    """z = ReLU(A_hat @ XW + b), K-tiled over adjacency columns."""

    def kernel(a_ref, xw_ref, b_ref, out_ref, acc_ref):
        k = pl.program_id(1)

        @pl.when(k == 0)
        def _():
            acc_ref[...] = jnp.zeros_like(acc_ref)

        if resident_xw:
            # XW is fully VMEM-resident; slice the current K window.
            off = pl.multiple_of(k * tk, tk)
            xw = xw_ref[pl.ds(off, tk), :]
        else:
            xw = xw_ref[...]

        # N^2-dominant matmul, f32 accumulation on the MXU.
        acc_ref[...] += jnp.dot(a_ref[...], xw, preferred_element_type=jnp.float32)

        @pl.when(k == pl.num_programs(1) - 1)
        def _():
            out_ref[...] = jnp.maximum(acc_ref[...] + b_ref[...], 0.0).astype(out_ref.dtype)

    return kernel


def _projection_kernel(z_ref, w1_ref, b1_ref, w2_ref, b2_ref, out_ref):
    """out = ELU(z @ W1 + b1) @ W2 + b2   (ELU with alpha = 1.0)."""
    h = jnp.dot(z_ref[...], w1_ref[...],
                preferred_element_type=jnp.float32) + b1_ref[...]
    h = jnp.where(h > 0.0, h, jnp.expm1(h))
    out_ref[...] = (
        jnp.dot(h.astype(w2_ref.dtype), w2_ref[...],
                preferred_element_type=jnp.float32) + b2_ref[...]
    )


# ---------------------------------------------------------------------------
# Kernel wrappers
# ---------------------------------------------------------------------------
def gcn_encoder(adj_p, xw_p, b_p):
    """adj_p: [Np, Np] bf16, xw_p: [Np, Hp] bf16, b_p: [1, Hp] f32 -> [Np, Hp] bf16."""
    n_pad, h_pad = xw_p.shape
    tm = _pick_tile(n_pad)
    tk = _pick_tile(n_pad)
    grid = (n_pad // tm, n_pad // tk)

    resident_xw = n_pad * h_pad * 2 <= XW_RESIDENT_BYTES
    if resident_xw:
        xw_spec = pl.BlockSpec((n_pad, h_pad), lambda i, k: (0, 0))  # loaded once, stays resident
        xw_reads = 1
    else:
        xw_spec = pl.BlockSpec((tk, h_pad), lambda i, k: (k, 0))     # streamed per K tile
        xw_reads = n_pad // tm

    flops = 2 * n_pad * n_pad * h_pad
    bytes_accessed = (n_pad * n_pad * 2                  # adjacency (bf16), single pass
                      + xw_reads * n_pad * h_pad * 2     # XW
                      + h_pad * 4                        # bias
                      + n_pad * h_pad * 2)               # bf16 output writeback

    return pl.pallas_call(
        _make_gcn_kernel(tk, resident_xw),
        out_shape=jax.ShapeDtypeStruct((n_pad, h_pad), jnp.bfloat16),
        grid_spec=pltpu.PrefetchScalarGridSpec(
            num_scalar_prefetch=0,
            grid=grid,
            in_specs=[
                pl.BlockSpec((tm, tk), lambda i, k: (i, k)),   # A tile
                xw_spec,                                       # XW (resident or streamed)
                pl.BlockSpec((1, h_pad), lambda i, k: (0, 0)),  # bias resident
            ],
            out_specs=pl.BlockSpec((tm, h_pad), lambda i, k: (i, 0)),
            scratch_shapes=[pltpu.VMEM((tm, h_pad), jnp.float32)],  # f32 acc, bf16 output
        ),
        compiler_params=pltpu.CompilerParams(
            dimension_semantics=("parallel", "arbitrary")),
        cost_estimate=pl.CostEstimate(
            flops=flops, transcendentals=0, bytes_accessed=bytes_accessed),
    )(adj_p, xw_p, b_p)


def projection_head(z_p, w1_p, b1_p, w2_p, b2_p):
    """z_p: [Np, Hp] bf16; returns [Np, Hp] f32."""
    n_pad, h_pad = z_p.shape
    p_pad = w1_p.shape[1]
    tm = _pick_tile(n_pad)
    grid = (n_pad // tm,)

    flops = 2 * n_pad * h_pad * p_pad + 2 * n_pad * p_pad * h_pad
    bytes_accessed = (n_pad * h_pad * 2 + h_pad * p_pad * 2
                      + p_pad * h_pad * 2 + n_pad * h_pad * 4)

    return pl.pallas_call(
        _projection_kernel,
        out_shape=jax.ShapeDtypeStruct((n_pad, h_pad), jnp.float32),
        grid=grid,
        in_specs=[
            pl.BlockSpec((tm, h_pad), lambda i: (i, 0)),      # z tile
            pl.BlockSpec((h_pad, p_pad), lambda i: (0, 0)),   # W1 resident
            pl.BlockSpec((1, p_pad), lambda i: (0, 0)),       # b1 resident
            pl.BlockSpec((p_pad, h_pad), lambda i: (0, 0)),   # W2 resident
            pl.BlockSpec((1, h_pad), lambda i: (0, 0)),       # b2 resident
        ],
        out_specs=pl.BlockSpec((tm, h_pad), lambda i: (i, 0)),
        compiler_params=pltpu.CompilerParams(
            dimension_semantics=("parallel",)),
        cost_estimate=pl.CostEstimate(
            flops=flops, transcendentals=n_pad * p_pad,
            bytes_accessed=bytes_accessed),
    )(z_p, w1_p, b1_p, w2_p, b2_p)


# ---------------------------------------------------------------------------
# Jitted glue: padded adjacency build (bf16, one pass), XW precompute, encode.
# ---------------------------------------------------------------------------
@functools.partial(jax.jit, static_argnums=(3, 4, 5))
def _encode_padded(x, edge_index, edge_weight, num_nodes, n_pad, h_pad,
                   w_enc_bf16, b_enc_p):
    src, dst = edge_index[0], edge_index[1]
    ew = (jnp.ones(src.shape, jnp.float32) if edge_weight is None
          else edge_weight.astype(jnp.float32))

    # Normalized adjacency built directly at the padded shape, cast to bf16 once.
    adj = jnp.zeros((n_pad, n_pad), jnp.float32)
    adj = adj.at[src, dst].add(ew)
    idx = jnp.arange(num_nodes)
    adj = adj.at[idx, idx].add(1.0)                  # self-loops on real nodes only
    deg = jnp.sum(adj, axis=1)
    dinv = jnp.where(deg > 0.0, jax.lax.rsqrt(deg), 0.0)
    adj_p = (adj * dinv[:, None] * dinv[None, :]).astype(jnp.bfloat16)

    # XW precompute (tiny [N,F]@[F,H]); padded rows of x are zero -> padded XW rows zero.
    x_p = jnp.pad(x, ((0, n_pad - num_nodes), (0, 0))).astype(jnp.bfloat16)
    xw = jnp.dot(x_p, w_enc_bf16, preferred_element_type=jnp.float32).astype(jnp.bfloat16)
    xw_p = jnp.pad(xw, ((0, 0), (0, h_pad - xw.shape[1])))

    return gcn_encoder(adj_p, xw_p, b_enc_p)


@functools.partial(jax.jit, static_argnums=(5, 6))
def _project_from_unpadded(z, w1_p, b1_p, w2_p, b2_p, n_pad, h_pad):
    z_p = jnp.pad(z.astype(jnp.bfloat16),
                  ((0, n_pad - z.shape[0]), (0, h_pad - z.shape[1])))
    return projection_head(z_p, w1_p, b1_p, w2_p, b2_p)


_projection_head_jit = jax.jit(projection_head)


# ---------------------------------------------------------------------------
# L2L module (JAX / Pallas)
# ---------------------------------------------------------------------------
class L2L:
    def __init__(self, key, num_features, hidden_dim, proj_dim):
        k1, k2, k3, k4, k5, k6 = jax.random.split(key, 6)
        self.num_hidden = hidden_dim
        self.h_pad = _round_up(hidden_dim, LANE)
        self.p_pad = _round_up(proj_dim, LANE)

        # stand-in encoder parameters (injected torch.nn.Module in the original)
        w_enc = 0.1 * jax.random.normal(k1, (num_features, hidden_dim), jnp.float32)
        b_enc = 0.1 * jax.random.normal(k2, (1, hidden_dim), jnp.float32)
        # projection head parameters actually owned by L2L (fc1, fc2)
        w1 = 0.1 * jax.random.normal(k3, (hidden_dim, proj_dim), jnp.float32)
        b1 = 0.1 * jax.random.normal(k4, (1, proj_dim), jnp.float32)
        w2 = 0.1 * jax.random.normal(k5, (proj_dim, hidden_dim), jnp.float32)
        b2 = 0.1 * jax.random.normal(k6, (1, hidden_dim), jnp.float32)

        # Encoder weight is consumed by the (XLA) XW precompute, so it stays unpadded.
        self.w_enc_bf16 = w_enc.astype(jnp.bfloat16)
        self.b_enc_p = _pad2(b_enc, 1, self.h_pad)              # f32, zero in padded lanes
        # Projection-head weights lane-padded; matmul operands stored bf16, biases f32.
        self.w1_p = _pad2(w1, self.h_pad, self.p_pad).astype(jnp.bfloat16)
        self.b1_p = _pad2(b1, 1, self.p_pad)
        self.w2_p = _pad2(w2, self.p_pad, self.h_pad).astype(jnp.bfloat16)
        self.b2_p = _pad2(b2, 1, self.h_pad)

        # Cache of the padded bf16 z so projection() can skip the slice -> re-pad
        # -> cast round trip when given the z returned by forward().
        self._z_pad_cache = None
        self._z_slice_cache = None
        self._n_cache = None

    def encoder(self, x, edge_index, edge_weight=None):
        n = x.shape[0]
        n_pad = _round_up(n, LANE)
        z_p = _encode_padded(x, edge_index, edge_weight, n, n_pad, self.h_pad,
                             self.w_enc_bf16, self.b_enc_p)
        return z_p  # padded bf16; padded rows hold ReLU(b) garbage, sliced off by callers

    def forward(self, x, edge_index, edge_weight=None):
        n = x.shape[0]
        # TODO(synk): augmentors are injected policy objects (edge drop / feature
        # masking) with no definition inside this module; identity augmentation is
        # used, so z1 == z2 == z and the encoder runs once.
        z_p = self.encoder(x, edge_index, edge_weight)
        z = z_p[:n, :self.num_hidden].astype(jnp.float32)
        self._z_pad_cache, self._z_slice_cache, self._n_cache = z_p, z, n
        return z, z, z

    def projection(self, z):
        if z is self._z_slice_cache and self._z_pad_cache is not None:
            # Fast path: reuse the padded bf16 z straight out of the encoder.
            out_p = _projection_head_jit(self._z_pad_cache, self.w1_p, self.b1_p,
                                         self.w2_p, self.b2_p)
            n = self._n_cache
        else:
            n = z.shape[0]
            n_pad = _round_up(n, LANE)
            out_p = _project_from_unpadded(z, self.w1_p, self.b1_p, self.w2_p,
                                           self.b2_p, n_pad, self.h_pad)
        return out_p[:n, :self.num_hidden]


# ---------------------------------------------------------------------------
if __name__ == "__main__":
    key = jax.random.PRNGKey(0)
    k_x, k_model = jax.random.split(key)

    N, F_IN, HIDDEN, PROJ = 256, 16, 32, 16

    # deterministic node features
    x = jax.random.normal(k_x, (N, F_IN), jnp.float32)

    # deterministic ring graph (both directions): edge_index is [2, E]
    src = jnp.arange(N, dtype=jnp.int32)
    dst = (src + 1) % N
    edge_index = jnp.concatenate(
        [jnp.stack([src, dst]), jnp.stack([dst, src])], axis=1
    )  # [2, 2N]

    model = L2L(k_model, F_IN, HIDDEN, PROJ)

    z, z1, z2 = model.forward(x, edge_index, None)
    p = model.projection(z)

    jax.block_until_ready((z, z1, z2, p))

    assert z.shape == (N, HIDDEN) and z1.shape == (N, HIDDEN) and z2.shape == (N, HIDDEN)
    assert p.shape == (N, HIDDEN)
    assert bool(jnp.all(jnp.isfinite(z))) and bool(jnp.all(jnp.isfinite(p)))
    print("KERNEL_OK")
</pallas_src>

<mosaic_0001>
module attributes {stable_mosaic.version = 11 : i64} {
  func.func private @main(%arg0: i32) attributes {dimension_semantics = [#tpu.dimension_semantics<core_parallel>], iteration_bounds = array<i64: 2>, tpu.core_type = #tpu.core_type<sc_scalar_subcore>, window_params = []} {
    return
  }
}

module attributes {stable_mosaic.version = 11 : i64} {
  func.func private @main(%arg0: i32) attributes {dimension_semantics = [#tpu.dimension_semantics<core_parallel>], iteration_bounds = array<i64: 2>, tpu.core_type = #tpu.core_type<sc_scalar_subcore>, window_params = []} {
    return
  }
}

module attributes {stable_mosaic.version = 11 : i64} {
  func.func @kernel(%arg0: i32, %arg1: i32, %arg2: memref<256x256xbf16, #tpu.memory_space<vmem>>, %arg3: memref<256x128xbf16, #tpu.memory_space<vmem>>, %arg4: memref<1x128xf32, #tpu.memory_space<vmem>>, %arg5: memref<256x128xbf16, #tpu.memory_space<vmem>>, %arg6: memref<256x128xf32, #tpu.memory_space<vmem>>) attributes {dimension_semantics = [#tpu.dimension_semantics<parallel>, #tpu.dimension_semantics<arbitrary>], iteration_bounds = array<i64: 1, 1>, scalar_prefetch = 0 : i64, scratch_operands = 1 : i64, tpu.core_type = #tpu.core_type<tc>, window_params = [{transform_indices = @transform_0, window_bounds = array<i64: 256, 256>}, {pipeline_mode = #tpu.pipeline_mode<synchronous>, transform_indices = @transform_1, window_bounds = array<i64: 256, 128>}, {pipeline_mode = #tpu.pipeline_mode<synchronous>, transform_indices = @transform_2, window_bounds = array<i64: 1, 128>}, {transform_indices = @transform_3, window_bounds = array<i64: 256, 128>}]} {
    %c0_i32 = arith.constant 0 : i32
    %0 = arith.cmpi eq, %arg1, %c0_i32 : i32
    %1 = arith.extui %0 : i1 to i32
    %c0_i32_0 = arith.constant 0 : i32
    %2 = arith.cmpi ne, %1, %c0_i32_0 : i32
    scf.if %2 {
      %cst_9 = arith.constant 0.000000e+00 : f32
      %15 = vector.broadcast %cst_9 : f32 to vector<256x128xf32>
      %c0_10 = arith.constant 0 : index
      %c0_11 = arith.constant 0 : index
      %16 = vector.load %arg6[%c0_10, %c0_11] : memref<256x128xf32, #tpu.memory_space<vmem>>, vector<256x128xf32>
      tpu.vector_store %arg6[%c0_10, %c0_11], %15 {strides = array<i32>} : memref<256x128xf32, #tpu.memory_space<vmem>>, vector<256x128xf32>,
    } else {
    }
    %c256_i32 = arith.constant 256 : i32
    %3 = arith.muli %arg1, %c256_i32 : i32
    %4 = tpu.assume_multiple %3, 256 : i32
    %5 = arith.index_cast %4 : i32 to index
    %c0 = arith.constant 0 : index
    %6 = vector.load %arg3[%5, %c0] : memref<256x128xbf16, #tpu.memory_space<vmem>>, vector<256x128xbf16>
    %c0_1 = arith.constant 0 : index
    %c0_2 = arith.constant 0 : index
    %7 = vector.load %arg6[%c0_1, %c0_2] : memref<256x128xf32, #tpu.memory_space<vmem>>, vector<256x128xf32>
    %c0_3 = arith.constant 0 : index
    %c0_4 = arith.constant 0 : index
    %8 = vector.load %arg2[%c0_3, %c0_4] : memref<256x256xbf16, #tpu.memory_space<vmem>>, vector<256x256xbf16>
    %cst = arith.constant dense<0.000000e+00> : vector<256x128xf32>
    %9 = tpu.matmul %8, %6, %cst {dimension_numbers = #tpu.dot_dimension_numbers<[1], [0], [0], [1], [0, 0, 1, 1], [], []>} : vector<256x256xbf16>, vector<256x128xbf16>, vector<256x128xf32> -> vector<256x128xf32>
    %10 = arith.addf %7, %9 : vector<256x128xf32>
    %c0_5 = arith.constant 0 : index
    %c0_6 = arith.constant 0 : index
    %11 = vector.load %arg6[%c0_5, %c0_6] : memref<256x128xf32, #tpu.memory_space<vmem>>, vector<256x128xf32>
    tpu.vector_store %arg6[%c0_5, %c0_6], %10 {strides = array<i32>} : memref<256x128xf32, #tpu.memory_space<vmem>>, vector<256x128xf32>,
    %c0_i32_7 = arith.constant 0 : i32
    %12 = arith.cmpi eq, %arg1, %c0_i32_7 : i32
    %13 = arith.extui %12 : i1 to i32
    %c0_i32_8 = arith.constant 0 : i32
    %14 = arith.cmpi ne, %13, %c0_i32_8 : i32
    scf.if %14 {
      %c0_9 = arith.constant 0 : index
      %c0_10 = arith.constant 0 : index
      %15 = vector.load %arg6[%c0_9, %c0_10] : memref<256x128xf32, #tpu.memory_space<vmem>>, vector<256x128xf32>
      %c0_11 = arith.constant 0 : index
      %c0_12 = arith.constant 0 : index
      %16 = vector.load %arg4[%c0_11, %c0_12] : memref<1x128xf32, #tpu.memory_space<vmem>>, vector<1x128xf32>
      %17 = vector.broadcast %16 : vector<1x128xf32> to vector<256x128xf32>
      %18 = arith.addf %15, %17 : vector<256x128xf32>
      %cst_13 = arith.constant 0.000000e+00 : f32
      %19 = vector.broadcast %cst_13 : f32 to vector<256x128xf32>
      %20 = arith.maximumf %18, %19 : vector<256x128xf32>
      %21 = arith.truncf %20 : vector<256x128xf32> to vector<256x128xbf16>
      %c0_14 = arith.constant 0 : index
      %c0_15 = arith.constant 0 : index
      %22 = vector.load %arg5[%c0_14, %c0_15] : memref<256x128xbf16, #tpu.memory_space<vmem>>, vector<256x128xbf16>
      tpu.vector_store %arg5[%c0_14, %c0_15], %21 {strides = array<i32>} : memref<256x128xbf16, #tpu.memory_space<vmem>>, vector<256x128xbf16>,
    } else {
    }
    return
  }
  func.func @transform_0(%arg0: i32, %arg1: i32) -> (i32, i32) {
    %c0_i32 = arith.constant 0 : i32
    return %arg0, %arg1 : i32, i32
  }
  func.func @transform_1(%arg0: i32, %arg1: i32) -> (i32, i32) {
    %c0_i32 = arith.constant 0 : i32
    %c0_i32_0 = arith.constant 0 : i32
    %c0_i32_1 = arith.constant 0 : i32
    return %c0_i32, %c0_i32_0 : i32, i32
  }
  func.func @transform_2(%arg0: i32, %arg1: i32) -> (i32, i32) {
    %c0_i32 = arith.constant 0 : i32
    %c0_i32_0 = arith.constant 0 : i32
    %c0_i32_1 = arith.constant 0 : i32
    return %c0_i32, %c0_i32_0 : i32, i32
  }
  func.func @transform_3(%arg0: i32, %arg1: i32) -> (i32, i32) {
    %c0_i32 = arith.constant 0 : i32
    %c0_i32_0 = arith.constant 0 : i32
    return %arg0, %c0_i32 : i32, i32
  }
}

</mosaic_0001>

<llo_original>
// kernel: _encode_padded.1
$region0: #{_encode_padded.1}
  #allocation0 [shape = 'u32[]', space=smem, size = 0x4, offset = 0x4, fixed_abs, tag = 'smem constant byte address 0x4 - core index']
  #allocation1 [shape = 'u32[144,128]{1,0:T(1,128)}', space=vmem, size = 0x12000, scoped, tag = 'internal scratch']
  #allocation2 [shape = 'f32[256,128]{1,0:T(8,128)}', space=vmem, size = 0x20000, scoped, tag = 'scratch operand']
  %s0 = inlined_call_operand.vmem [shape: bf16[256,256], index: 0, kind: input, shape index: {}]
  %s1 = inlined_call_operand.vmem [shape: bf16[256,128], index: 1, kind: input, shape index: {}]
  %s2 = inlined_call_operand.vmem [shape: f32[1,128], index: 2, kind: input, shape index: {}]
  %s3 = inlined_call_operand.hbm [shape: bf16[256,128], index: 3, kind: output, shape index: {}]
  %s4 = sld [smem:[#allocation0]]
  $region30: #{_encode_padded.1} parent=0
    _
  %s6 = ssub.s32 1, %s4
  %s7 = scalar_select 0, %s6, %s4
  $region1: #{_encode_padded.1} parent=0
    #allocation3 [shape = 'u8[65536]{0}', space=vmem, size = 0x10000, scoped, tag = 'output window, operand 0, single buffered']
    #allocation4 [shape = 's32[1]{0}', space=sflag, size = 0x4, scoped, tag = 'scoped memory for _encode_padded.1']
    %8 = vsyncpa [#allocation4], 0
    // Predicated region
    $region2: #{_encode_padded.1} parent=1 // pred_check
      _
    $region3: #{_encode_padded.1} parent=1 // pred_check_branch
      %10 = sbr.rel (0) target = $region5
    $region4: #{_encode_padded.1} parent=1 // pred_region
      _
    $region5: #{_encode_padded.1} parent=1 // pred_fallthru
      _
    // Predicated region
    $region6: #{_encode_padded.1} parent=1 // pred_check
      _
    $region7: #{_encode_padded.1} parent=1 // pred_check_branch
      %12 = sbr.rel (0) target = $region9
    $region8: #{_encode_padded.1} parent=1 // pred_region
      _
    $region9: #{_encode_padded.1} parent=1 // pred_fallthru
      _
    // Predicated region
    $region10: #{_encode_padded.1} parent=1 // pred_check
      _
    $region11: #{_encode_padded.1} parent=1 // pred_check_branch
      %14 = sbr.rel (0) target = $region13
    $region12: #{_encode_padded.1} parent=1 // pred_region
      _
    $region13: #{_encode_padded.1} parent=1 // pred_fallthru
      _
    %p16 = scmp.eq.s32.totalorder 0, 0
    // Predicated region
    $region14: #{_encode_padded.1} parent=1 // pred_check
      %p17 = pneg %p16
    $region15: #{_encode_padded.1} parent=1 // pred_check_branch
      %19 = sbr.rel (%p17) target = $region17
    $region16: #{_encode_padded.1} parent=1 // pred_region
      %20 = vst [vmem:[#allocation2] sm:$0xff] 0.0
      %21 = vst [vmem:[#allocation2 + $0x8] sm:$0xff] 0.0
      %22 = vst [vmem:[#allocation2 + $0x10] sm:$0xff] 0.0
      %23 = vst [vmem:[#allocation2 + $0x18] sm:$0xff] 0.0
      %24 = vst [vmem:[#allocation2 + $0x20] sm:$0xff] 0.0
      %25 = vst [vmem:[#allocation2 + $0x28] sm:$0xff] 0.0
      %26 = vst [vmem:[#allocation2 + $0x30] sm:$0xff] 0.0
      %27 = vst [vmem:[#allocation2 + $0x38] sm:$0xff] 0.0
      %28 = vst [vmem:[#allocation2 + $0x40] sm:$0xff] 0.0
      %29 = vst [vmem:[#allocation2 + $0x48] sm:$0xff] 0.0
      %30 = vst [vmem:[#allocation2 + $0x50] sm:$0xff] 0.0
      %31 = vst [vmem:[#allocation2 + $0x58] sm:$0xff] 0.0
      %32 = vst [vmem:[#allocation2 + $0x60] sm:$0xff] 0.0
      %33 = vst [vmem:[#allocation2 + $0x68] sm:$0xff] 0.0
      %34 = vst [vmem:[#allocation2 + $0x70] sm:$0xff] 0.0
      %35 = vst [vmem:[#allocation2 + $0x78] sm:$0xff] 0.0
      %36 = vst [vmem:[#allocation2 + $0x80] sm:$0xff] 0.0
      %37 = vst [vmem:[#allocation2 + $0x88] sm:$0xff] 0.0
      %38 = vst [vmem:[#allocation2 + $0x90] sm:$0xff] 0.0
      %39 = vst [vmem:[#allocation2 + $0x98] sm:$0xff] 0.0
      %40 = vst [vmem:[#allocation2 + $0xa0] sm:$0xff] 0.0
      %41 = vst [vmem:[#allocation2 + $0xa8] sm:$0xff] 0.0
      %42 = vst [vmem:[#allocation2 + $0xb0] sm:$0xff] 0.0
      %43 = vst [vmem:[#allocation2 + $0xb8] sm:$0xff] 0.0
      %44 = vst [vmem:[#allocation2 + $0xc0] sm:$0xff] 0.0
      %45 = vst [vmem:[#allocation2 + $0xc8] sm:$0xff] 0.0
      %46 = vst [vmem:[#allocation2 + $0xd0] sm:$0xff] 0.0
      %47 = vst [vmem:[#allocation2 + $0xd8] sm:$0xff] 0.0
      %48 = vst [vmem:[#allocation2 + $0xe0] sm:$0xff] 0.0
      %49 = vst [vmem:[#allocation2 + $0xe8] sm:$0xff] 0.0
      %50 = vst [vmem:[#allocation2 + $0xf0] sm:$0xff] 0.0
      %51 = vst [vmem:[#allocation2 + $0xf8] sm:$0xff] 0.0
    $region17: #{_encode_padded.1} parent=1 // pred_fallthru
      _
    %s52 = smul.u32 0, 256
    %s53 = sshra.s32 %s52, 3
    %s54 = sand.u32 %s52, 7
    %s55 = smul.addr %s53, 4
    %s56 = scalar_lea.vmem %s1, %s55
    %v57 = vld [vmem:[%s56] sm:$0xf]
    %v58 = vld [vmem:[%s56 + $0x4] sm:$0xf]
    %v59 = vld [vmem:[%s56 + $0x8] sm:$0xf]
    %v60 = vld [vmem:[%s56 + $0xc] sm:$0xf]
    %v61 = vld [vmem:[%s56 + $0x10] sm:$0xf]
    %v62 = vld [vmem:[%s56 + $0x14] sm:$0xf]
    %v63 = vld [vmem:[%s56 + $0x18] sm:$0xf]
    %v64 = vld [vmem:[%s56 + $0x1c] sm:$0xf]
    %v65 = vld [vmem:[%s56 + $0x20] sm:$0xf]
    %v66 = vld [vmem:[%s56 + $0x24] sm:$0xf]
    %v67 = vld [vmem:[%s56 + $0x28] sm:$0xf]
    %v68 = vld [vmem:[%s56 + $0x2c] sm:$0xf]
    %v69 = vld [vmem:[%s56 + $0x30] sm:$0xf]
    %v70 = vld [vmem:[%s56 + $0x34] sm:$0xf]
    %v71 = vld [vmem:[%s56 + $0x38] sm:$0xf]
    %v72 = vld [vmem:[%s56 + $0x3c] sm:$0xf]
    %v73 = vld [vmem:[%s56 + $0x40] sm:$0xf]
    %v74 = vld [vmem:[%s56 + $0x44] sm:$0xf]
    %v75 = vld [vmem:[%s56 + $0x48] sm:$0xf]
    %v76 = vld [vmem:[%s56 + $0x4c] sm:$0xf]
    %v77 = vld [vmem:[%s56 + $0x50] sm:$0xf]
    %v78 = vld [vmem:[%s56 + $0x54] sm:$0xf]
    %v79 = vld [vmem:[%s56 + $0x58] sm:$0xf]
    %v80 = vld [vmem:[%s56 + $0x5c] sm:$0xf]
    %v81 = vld [vmem:[%s56 + $0x60] sm:$0xf]
    %v82 = vld [vmem:[%s56 + $0x64] sm:$0xf]
    %v83 = vld [vmem:[%s56 + $0x68] sm:$0xf]
    %v84 = vld [vmem:[%s56 + $0x6c] sm:$0xf]
    %v85 = vld [vmem:[%s56 + $0x70] sm:$0xf]
    %v86 = vld [vmem:[%s56 + $0x74] sm:$0xf]
    %v87 = vld [vmem:[%s56 + $0x78] sm:$0xf]
    %v88 = vld [vmem:[%s56 + $0x7c] sm:$0xf]
    %v89 = vld [vmem:[#allocation2] sm:$0xff]
    %v90 = vld [vmem:[#allocation2 + $0x8] sm:$0xff]
    %v91 = vld [vmem:[#allocation2 + $0x10] sm:$0xff]
    %v92 = vld [vmem:[#allocation2 + $0x18] sm:$0xff]
    %v93 = vld [vmem:[#allocation2 + $0x20] sm:$0xff]
    %v94 = vld [vmem:[#allocation2 + $0x28] sm:$0xff]
    %v95 = vld [vmem:[#allocation2 + $0x30] sm:$0xff]
    %v96 = vld [vmem:[#allocation2 + $0x38] sm:$0xff]
    %v97 = vld [vmem:[#allocation2 + $0x40] sm:$0xff]
    %v98 = vld [vmem:[#allocation2 + $0x48] sm:$0xff]
    %v99 = vld [vmem:[#allocation2 + $0x50] sm:$0xff]
    %v100 = vld [vmem:[#allocation2 + $0x58] sm:$0xff]
    %v101 = vld [vmem:[#allocation2 + $0x60] sm:$0xff]
    %v102 = vld [vmem:[#allocation2 + $0x68] sm:$0xff]
    %v103 = vld [vmem:[#allocation2 + $0x70] sm:$0xff]
    %v104 = vld [vmem:[#allocation2 + $0x78] sm:$0xff]
    %v105 = vld [vmem:[#allocation2 + $0x80] sm:$0xff]
    %v106 = vld [vmem:[#allocation2 + $0x88] sm:$0xff]
    %v107 = vld [vmem:[#allocation2 + $0x90] sm:$0xff]
    %v108 = vld [vmem:[#allocation2 + $0x98] sm:$0xff]
    %v109 = vld [vmem:[#allocation2 + $0xa0] sm:$0xff]
    %v110 = vld [vmem:[#allocation2 + $0xa8] sm:$0xff]
    %v111 = vld [vmem:[#allocation2 + $0xb0] sm:$0xff]
    %v112 = vld [vmem:[#allocation2 + $0xb8] sm:$0xff]
    %v113 = vld [vmem:[#allocation2 + $0xc0] sm:$0xff]
    %v114 = vld [vmem:[#allocation2 + $0xc8] sm:$0xff]
    %v115 = vld [vmem:[#allocation2 + $0xd0] sm:$0xff]
    %v116 = vld [vmem:[#allocation2 + $0xd8] sm:$0xff]
    %v117 = vld [vmem:[#allocation2 + $0xe0] sm:$0xff]
    %v118 = vld [vmem:[#allocation2 + $0xe8] sm:$0xff]
    %v119 = vld [vmem:[#allocation2 + $0xf0] sm:$0xff]
    %v120 = vld [vmem:[#allocation2 + $0xf8] sm:$0xff]
    %v121 = vld [vmem:[%s0] sm:$0xff]
    %v122 = vld [vmem:[%s0 + $0x8] sm:$0xff]
    %v123 = vld [vmem:[%s0 + $0x10] sm:$0xff]
    %v124 = vld [vmem:[%s0 + $0x18] sm:$0xff]
    %v125 = vld [vmem:[%s0 + $0x20] sm:$0xff]
    %v126 = vld [vmem:[%s0 + $0x28] sm:$0xff]
    %v127 = vld [vmem:[%s0 + $0x30] sm:$0xff]
    %v128 = vld [vmem:[%s0 + $0x38] sm:$0xff]
    %v129 = vld [vmem:[%s0 + $0x40] sm:$0xff]
    %v130 = vld [vmem:[%s0 + $0x48] sm:$0xff]
    %v131 = vld [vmem:[%s0 + $0x50] sm:$0xff]
    %v132 = vld [vmem:[%s0 + $0x58] sm:$0xff]
    %v133 = vld [vmem:[%s0 + $0x60] sm:$0xff]
    %v134 = vld [vmem:[%s0 + $0x68] sm:$0xff]
    %v135 = vld [vmem:[%s0 + $0x70] sm:$0xff]
    %v136 = vld [vmem:[%s0 + $0x78] sm:$0xff]
    %v137 = vld [vmem:[%s0 + $0x80] sm:$0xff]
    %v138 = vld [vmem:[%s0 + $0x88] sm:$0xff]
    %v139 = vld [vmem:[%s0 + $0x90] sm:$0xff]
    %v140 = vld [vmem:[%s0 + $0x98] sm:$0xff]
    %v141 = vld [vmem:[%s0 + $0xa0] sm:$0xff]
    %v142 = vld [vmem:[%s0 + $0xa8] sm:$0xff]
    %v143 = vld [vmem:[%s0 + $0xb0] sm:$0xff]
    %v144 = vld [vmem:[%s0 + $0xb8] sm:$0xff]
    %v145 = vld [vmem:[%s0 + $0xc0] sm:$0xff]
    %v146 = vld [vmem:[%s0 + $0xc8] sm:$0xff]
    %v147 = vld [vmem:[%s0 + $0xd0] sm:$0xff]
    %v148 = vld [vmem:[%s0 + $0xd8] sm:$0xff]
    %v149 = vld [vmem:[%s0 + $0xe0] sm:$0xff]
    %v150 = vld [vmem:[%s0 + $0xe8] sm:$0xff]
    %v151 = vld [vmem:[%s0 + $0xf0] sm:$0xff]
    %v152 = vld [vmem:[%s0 + $0xf8] sm:$0xff]
    %v185 = vunpack.c.l.b16 %v121
    %v186 = vunpack.c.h.b16 %v121
    %v187 = vunpack.c.l.b16 %v122
    %v188 = vunpack.c.h.b16 %v122
    %v189 = vunpack.c.l.b16 %v123
    %v190 = vunpack.c.h.b16 %v123
    %v191 = vunpack.c.l.b16 %v124
    %v192 = vunpack.c.h.b16 %v124
    %v193 = vunpack.c.l.b16 %v125
    %v194 = vunpack.c.h.b16 %v125
    %v195 = vunpack.c.l.b16 %v126
    %v196 = vunpack.c.h.b16 %v126
    %v197 = vunpack.c.l.b16 %v127
    %v198 = vunpack.c.h.b16 %v127
    %v199 = vunpack.c.l.b16 %v128
    %v200 = vunpack.c.h.b16 %v128
    %v201 = vunpack.c.l.b16 %v129
    %v202 = vunpack.c.h.b16 %v129
    %v203 = vunpack.c.l.b16 %v130
    %v204 = vunpack.c.h.b16 %v130
    %v205 = vunpack.c.l.b16 %v131
    %v206 = vunpack.c.h.b16 %v131
    %v207 = vunpack.c.l.b16 %v132
    %v208 = vunpack.c.h.b16 %v132
    %v209 = vunpack.c.l.b16 %v133
    %v210 = vunpack.c.h.b16 %v133
    %v211 = vunpack.c.l.b16 %v134
    %v212 = vunpack.c.h.b16 %v134
    %v213 = vunpack.c.l.b16 %v135
    %v214 = vunpack.c.h.b16 %v135
    %v215 = vunpack.c.l.b16 %v136
    %v216 = vunpack.c.h.b16 %v136
    %v217 = vunpack.c.l.b16 %v137
    %v218 = vunpack.c.h.b16 %v137
    %v219 = vunpack.c.l.b16 %v138
    %v220 = vunpack.c.h.b16 %v138
    %v221 = vunpack.c.l.b16 %v139
    %v222 = vunpack.c.h.b16 %v139
    %v223 = vunpack.c.l.b16 %v140
    %v224 = vunpack.c.h.b16 %v140
    %v225 = vunpack.c.l.b16 %v141
    %v226 = vunpack.c.h.b16 %v141
    %v227 = vunpack.c.l.b16 %v142
    %v228 = vunpack.c.h.b16 %v142
    %v229 = vunpack.c.l.b16 %v143
    %v230 = vunpack.c.h.b16 %v143
    %v231 = vunpack.c.l.b16 %v144
    %v232 = vunpack.c.h.b16 %v144
    %v233 = vunpack.c.l.b16 %v145
    %v234 = vunpack.c.h.b16 %v145
    %v235 = vunpack.c.l.b16 %v146
    %v236 = vunpack.c.h.b16 %v146
    %v237 = vunpack.c.l.b16 %v147
    %v238 = vunpack.c.h.b16 %v147
    %v239 = vunpack.c.l.b16 %v148
    %v240 = vunpack.c.h.b16 %v148
    %v241 = vunpack.c.l.b16 %v149
    %v242 = vunpack.c.h.b16 %v149
    %v243 = vunpack.c.l.b16 %v150
    %v244 = vunpack.c.h.b16 %v150
    %v245 = vunpack.c.l.b16 %v151
    %v246 = vunpack.c.h.b16 %v151
    %v247 = vunpack.c.l.b16 %v152
    %v248 = vunpack.c.h.b16 %v152
    %v249 = vpack.c.b16 %v187, %v185
    %v250 = vpack.c.b16 %v188, %v186
    %v251 = vpack.c.b16 %v191, %v189
    %v252 = vpack.c.b16 %v192, %v190
    %v253 = vpack.c.b16 %v195, %v193
    %v254 = vpack.c.b16 %v196, %v194
    %v255 = vpack.c.b16 %v199, %v197
    %v256 = vpack.c.b16 %v200, %v198
    %v257 = vpack.c.b16 %v203, %v201
    %v258 = vpack.c.b16 %v204, %v202
    %v259 = vpack.c.b16 %v207, %v205
    %v260 = vpack.c.b16 %v208, %v206
    %v261 = vpack.c.b16 %v211, %v209
    %v262 = vpack.c.b16 %v212, %v210
    %v263 = vpack.c.b16 %v215, %v213
    %v264 = vpack.c.b16 %v216, %v214
    %v265 = vpack.c.b16 %v219, %v217
    %v266 = vpack.c.b16 %v220, %v218
    %v267 = vpack.c.b16 %v223, %v221
    %v268 = vpack.c.b16 %v224, %v222
    %v269 = vpack.c.b16 %v227, %v225
    %v270 = vpack.c.b16 %v228, %v226
    %v271 = vpack.c.b16 %v231, %v229
    %v272 = vpack.c.b16 %v232, %v230
    %v273 = vpack.c.b16 %v235, %v233
    %v274 = vpack.c.b16 %v236, %v234
    %v275 = vpack.c.b16 %v239, %v237
    %v276 = vpack.c.b16 %v240, %v238
    %v277 = vpack.c.b16 %v243, %v241
    %v278 = vpack.c.b16 %v244, %v242
    %v279 = vpack.c.b16 %v247, %v245
    %v280 = vpack.c.b16 %v248, %v246
    %v345 = vunpack.c.l.b16 %v57
    %v346 = vunpack.c.l.b16 %v58
    %v347 = vunpack.c.l.b16 %v59
    %v348 = vunpack.c.l.b16 %v60
    %v349 = vunpack.c.l.b16 %v61
    %v350 = vunpack.c.l.b16 %v62
    %v351 = vunpack.c.l.b16 %v63
    %v352 = vunpack.c.l.b16 %v64
    %v353 = vunpack.c.l.b16 %v65
    %v354 = vunpack.c.l.b16 %v66
    %v355 = vunpack.c.l.b16 %v67
    %v356 = vunpack.c.l.b16 %v68
    %v357 = vunpack.c.l.b16 %v69
    %v358 = vunpack.c.l.b16 %v70
    %v359 = vunpack.c.l.b16 %v71
    %v360 = vunpack.c.l.b16 %v72
    %v361 = vunpack.c.l.b16 %v73
    %v362 = vunpack.c.l.b16 %v74
    %v363 = vunpack.c.l.b16 %v75
    %v364 = vunpack.c.l.b16 %v76
    %v365 = vunpack.c.l.b16 %v77
    %v366 = vunpack.c.l.b16 %v78
    %v367 = vunpack.c.l.b16 %v79
    %v368 = vunpack.c.l.b16 %v80
    %v369 = vunpack.c.l.b16 %v81
    %v370 = vunpack.c.l.b16 %v82
    %v371 = vunpack.c.l.b16 %v83
    %v372 = vunpack.c.l.b16 %v84
    %v373 = vunpack.c.l.b16 %v85
    %v374 = vunpack.c.l.b16 %v86
    %v375 = vunpack.c.l.b16 %v87
    %v376 = vunpack.c.l.b16 %v88
    %v377 = vpack.c.b16 %v346, %v345
    %v378 = vpack.c.b16 %v348, %v347
    %v379 = vpack.c.b16 %v350, %v349
    %v380 = vpack.c.b16 %v352, %v351
    %v381 = vpack.c.b16 %v354, %v353
    %v382 = vpack.c.b16 %v356, %v355
    %v383 = vpack.c.b16 %v358, %v357
    %v384 = vpack.c.b16 %v360, %v359
    %v385 = vpack.c.b16 %v362, %v361
    %v386 = vpack.c.b16 %v364, %v363
    %v387 = vpack.c.b16 %v366, %v365
    %v388 = vpack.c.b16 %v368, %v367
    %v389 = vpack.c.b16 %v370, %v369
    %v390 = vpack.c.b16 %v372, %v371
    %v391 = vpack.c.b16 %v374, %v373
    %v392 = vpack.c.b16 %v376, %v375
    %409 = vmatprep.subr.bf16.mxu0 0
    %410 = vmatpush1.bf16.msra.mxu0 %v377
    %411 = vmatprep.subr.bf16.mxu0 0
    %412 = vmatpush1.bf16.msra.mxu0 %v378
    %413 = vmatprep.subr.bf16.mxu0 0
    %414 = vmatpush1.bf16.msra.mxu0 %v379
    %415 = vmatprep.subr.bf16.mxu0 0
    %416 = vmatpush1.bf16.msra.mxu0 %v380
    %417 = vmatprep.subr.bf16.mxu0 0
    %418 = vmatpush1.bf16.msra.mxu0 %v381
    %419 = vmatprep.subr.bf16.mxu0 0
    %420 = vmatpush1.bf16.msra.mxu0 %v382
    %421 = vmatprep.subr.bf16.mxu0 0
    %422 = vmatpush1.bf16.msra.mxu0 %v383
    %423 = vmatprep.subr.bf16.mxu0 0
    %424 = vmatpush1.bf16.msra.mxu0 %v384
    %425 = vmatprep.subr.bf16.mxu0 0
    %426 = vmatpush1.bf16.msra.mxu0 %v385
    %427 = vmatprep.subr.bf16.mxu0 0
    %428 = vmatpush1.bf16.msra.mxu0 %v386
    %429 = vmatprep.subr.bf16.mxu0 0
    %430 = vmatpush1.bf16.msra.mxu0 %v387
    %431 = vmatprep.subr.bf16.mxu0 0
    %432 = vmatpush1.bf16.msra.mxu0 %v388
    %433 = vmatprep.subr.bf16.mxu0 0
    %434 = vmatpush1.bf16.msra.mxu0 %v389
    %435 = vmatprep.subr.bf16.mxu0 0
    %436 = vmatpush1.bf16.msra.mxu0 %v390
    %437 = vmatprep.subr.bf16.mxu0 0
    %438 = vmatpush1.bf16.msra.mxu0 %v391
    %439 = vmatprep.subr.bf16.mxu0 0
    %440 = vmatpush1.bf16.msra.mxu0 %v392
    %441 = vmatprep.mubr.bf16.mxu0 %v250
    %442 = vmatmul.mubr.bf16.gmra.mrb[0].mxu0 %v249
    %v443 = vpop.f32.mrb[0].mxu0
    %v444 = vadd.f32 0.0, %v443
    %v445 = vpop.f32.mrb[0].mxu0
    %v446 = vpop.f32.mrb[0].mxu0
    %v447 = vadd.f32 0.0, %v446
    %v448 = vpop.f32.mrb[0].mxu0
    %449 = vmatprep.mubr.bf16.mxu0 %v252
    %450 = vmatmul.mubr.bf16.gmra.mrb[0].mxu0 %v251
    %v451 = vpop.f32.mrb[0].mxu0
    %v452 = vadd.f32 0.0, %v451
    %v453 = vpop.f32.mrb[0].mxu0
    %v454 = vpop.f32.mrb[0].mxu0
    %v455 = vadd.f32 0.0, %v454
    %v456 = vpop.f32.mrb[0].mxu0
    %457 = vmatprep.mubr.bf16.mxu0 %v254
    %458 = vmatmul.mubr.bf16.gmra.mrb[0].mxu0 %v253
    %v459 = vpop.f32.mrb[0].mxu0
    %v460 = vadd.f32 0.0, %v459
    %v461 = vpop.f32.mrb[0].mxu0
    %v462 = vpop.f32.mrb[0].mxu0
    %v463 = vadd.f32 0.0, %v462
    %v464 = vpop.f32.mrb[0].mxu0
    %465 = vmatprep.mubr.bf16.mxu0 %v256
    %466 = vmatmul.mubr.bf16.gmra.mrb[0].mxu0 %v255
    %v467 = vpop.f32.mrb[0].mxu0
    %v468 = vadd.f32 0.0, %v467
    %v469 = vpop.f32.mrb[0].mxu0
    %v470 = vpop.f32.mrb[0].mxu0
    %v471 = vadd.f32 0.0, %v470
    %v472 = vpop.f32.mrb[0].mxu0
    %473 = vmatprep.mubr.bf16.mxu0 %v258
    %474 = vmatmul.mubr.bf16.gmra.mrb[0].mxu0 %v257
    %v475 = vpop.f32.mrb[0].mxu0
    %v476 = vadd.f32 0.0, %v475
    %v477 = vpop.f32.mrb[0].mxu0
    %v478 = vpop.f32.mrb[0].mxu0
    %v479 = vadd.f32 0.0, %v478
    %v480 = vpop.f32.mrb[0].mxu0
    %481 = vmatprep.mubr.bf16.mxu0 %v260
    %482 = vmatmul.mubr.bf16.gmra.mrb[0].mxu0 %v259
    %v483 = vpop.f32.mrb[0].mxu0
    %v484 = vadd.f32 0.0, %v483
    %v485 = vpop.f32.mrb[0].mxu0
    %v486 = vpop.f32.mrb[0].mxu0
    %v487 = vadd.f32 0.0, %v486
    %v488 = vpop.f32.mrb[0].mxu0
    %489 = vmatprep.mubr.bf16.mxu0 %v262
    %490 = vmatmul.mubr.bf16.gmra.mrb[0].mxu0 %v261
    %v491 = vpop.f32.mrb[0].mxu0
    %v492 = vadd.f32 0.0, %v491
    %v493 = vpop.f32.mrb[0].mxu0
    %v494 = vpop.f32.mrb[0].mxu0
    %v495 = vadd.f32 0.0, %v494
    %v496 = vpop.f32.mrb[0].mxu0
    %497 = vmatprep.mubr.bf16.mxu0 %v264
    %498 = vmatmul.mubr.bf16.gmra.mrb[0].mxu0 %v263
    %v499 = vpop.f32.mrb[0].mxu0
    %v500 = vadd.f32 0.0, %v499
    %v501 = vpop.f32.mrb[0].mxu0
    %v502 = vpop.f32.mrb[0].mxu0
    %v503 = vadd.f32 0.0, %v502
    %v504 = vpop.f32.mrb[0].mxu0
    %505 = vmatprep.mubr.bf16.mxu0 %v266
    %506 = vmatmul.mubr.bf16.gmra.mrb[0].mxu0 %v265
    %v507 = vpop.f32.mrb[0].mxu0
    %v508 = vadd.f32 0.0, %v507
    %v509 = vpop.f32.mrb[0].mxu0
    %v510 = vpop.f32.mrb[0].mxu0
    %v511 = vadd.f32 0.0, %v510
    %v512 = vpop.f32.mrb[0].mxu0
    %513 = vmatprep.mubr.bf16.mxu0 %v268
    %514 = vmatmul.mubr.bf16.gmra.mrb[0].mxu0 %v267
    %v515 = vpop.f32.mrb[0].mxu0
    %v516 = vadd.f32 0.0, %v515
    %v517 = vpop.f32.mrb[0].mxu0
    %v518 = vpop.f32.mrb[0].mxu0
    %v519 = vadd.f32 0.0, %v518
    %v520 = vpop.f32.mrb[0].mxu0
    %521 = vmatprep.mubr.bf16.mxu0 %v270
    %522 = vmatmul.mubr.bf16.gmra.mrb[0].mxu0 %v269
    %v523 = vpop.f32.mrb[0].mxu0
    %v524 = vadd.f32 0.0, %v523
    %v525 = vpop.f32.mrb[0].mxu0
    %v526 = vpop.f32.mrb[0].mxu0
    %v527 = vadd.f32 0.0, %v526
    %v528 = vpop.f32.mrb[0].mxu0
    %529 = vmatprep.mubr.bf16.mxu0 %v272
    %530 = vmatmul.mubr.bf16.gmra.mrb[0].mxu0 %v271
    %v531 = vpop.f32.mrb[0].mxu0
    %v532 = vadd.f32 0.0, %v531
    %v533 = vpop.f32.mrb[0].mxu0
    %v534 = vpop.f32.mrb[0].mxu0
    %v535 = vadd.f32 0.0, %v534
    %v536 = vpop.f32.mrb[0].mxu0
    %537 = vmatprep.mubr.bf16.mxu0 %v274
    %538 = vmatmul.mubr.bf16.gmra.mrb[0].mxu0 %v273
    %v539 = vpop.f32.mrb[0].mxu0
    %v540 = vadd.f32 0.0, %v539
    %v541 = vpop.f32.mrb[0].mxu0
    %v542 = vpop.f32.mrb[0].mxu0
    %v543 = vadd.f32 0.0, %v542
    %v544 = vpop.f32.mrb[0].mxu0
    %545 = vmatprep.mubr.bf16.mxu0 %v276
    %546 = vmatmul.mubr.bf16.gmra.mrb[0].mxu0 %v275
    %v547 = vpop.f32.mrb[0].mxu0
    %v548 = vadd.f32 0.0, %v547
    %v549 = vpop.f32.mrb[0].mxu0
    %v550 = vpop.f32.mrb[0].mxu0
    %v551 = vadd.f32 0.0, %v550
    %v552 = vpop.f32.mrb[0].mxu0
    %553 = vmatprep.mubr.bf16.mxu0 %v278
    %554 = vmatmul.mubr.bf16.gmra.mrb[0].mxu0 %v277
    %v555 = vpop.f32.mrb[0].mxu0
    %v556 = vadd.f32 0.0, %v555
    %v557 = vpop.f32.mrb[0].mxu0
    %v558 = vpop.f32.mrb[0].mxu0
    %v559 = vadd.f32 0.0, %v558
    %v560 = vpop.f32.mrb[0].mxu0
    %561 = vmatprep.mubr.bf16.mxu0 %v280
    %562 = vmatmul.mubr.bf16.gmra.mrb[0].mxu0 %v279
    %v563 = vpop.f32.mrb[0].mxu0
    %v564 = vadd.f32 0.0, %v563
    %v565 = vpop.f32.mrb[0].mxu0
    %v566 = vpop.f32.mrb[0].mxu0
    %v567 = vadd.f32 0.0, %v566
    %v568 = vpop.f32.mrb[0].mxu0
    %569 = vdwg.mxu0
    %v570 = vadd.f32 %v89, %v444
    %v571 = vadd.f32 %v90, %v447
    %v572 = vadd.f32 %v91, %v452
    %v573 = vadd.f32 %v92, %v455
    %v574 = vadd.f32 %v93, %v460
    %v575 = vadd.f32 %v94, %v463
    %v576 = vadd.f32 %v95, %v468
    %v577 = vadd.f32 %v96, %v471
    %v578 = vadd.f32 %v97, %v476
    %v579 = vadd.f32 %v98, %v479
    %v580 = vadd.f32 %v99, %v484
    %v581 = vadd.f32 %v100, %v487
    %v582 = vadd.f32 %v101, %v492
    %v583 = vadd.f32 %v102, %v495
    %v584 = vadd.f32 %v103, %v500
    %v585 = vadd.f32 %v104, %v503
    %v586 = vadd.f32 %v105, %v508
    %v587 = vadd.f32 %v106, %v511
    %v588 = vadd.f32 %v107, %v516
    %v589 = vadd.f32 %v108, %v519
    %v590 = vadd.f32 %v109, %v524
    %v591 = vadd.f32 %v110, %v527
    %v592 = vadd.f32 %v111, %v532
    %v593 = vadd.f32 %v112, %v535
    %v594 = vadd.f32 %v113, %v540
    %v595 = vadd.f32 %v114, %v543
    %v596 = vadd.f32 %v115, %v548
    %v597 = vadd.f32 %v116, %v551
    %v598 = vadd.f32 %v117, %v556
    %v599 = vadd.f32 %v118, %v559
    %v600 = vadd.f32 %v119, %v564
    %v601 = vadd.f32 %v120, %v567
    %602 = vst [vmem:[#allocation2] sm:$0xff] %v570
    %603 = vst [vmem:[#allocation2 + $0x8] sm:$0xff] %v571
    %604 = vst [vmem:[#allocation2 + $0x10] sm:$0xff] %v572
    %605 = vst [vmem:[#allocation2 + $0x18] sm:$0xff] %v573
    %606 = vst [vmem:[#allocation2 + $0x20] sm:$0xff] %v574
    %607 = vst [vmem:[#allocation2 + $0x28] sm:$0xff] %v575
    %608 = vst [vmem:[#allocation2 + $0x30] sm:$0xff] %v576
    %609 = vst [vmem:[#allocation2 + $0x38] sm:$0xff] %v577
    %610 = vst [vmem:[#allocation2 + $0x40] sm:$0xff] %v578
    %611 = vst [vmem:[#allocation2 + $0x48] sm:$0xff] %v579
    %612 = vst [vmem:[#allocation2 + $0x50] sm:$0xff] %v580
    %613 = vst [vmem:[#allocation2 + $0x58] sm:$0xff] %v581
    %614 = vst [vmem:[#allocation2 + $0x60] sm:$0xff] %v582
    %615 = vst [vmem:[#allocation2 + $0x68] sm:$0xff] %v583
    %616 = vst [vmem:[#allocation2 + $0x70] sm:$0xff] %v584
    %617 = vst [vmem:[#allocation2 + $0x78] sm:$0xff] %v585
    %618 = vst [vmem:[#allocation2 + $0x80] sm:$0xff] %v586
    %619 = vst [vmem:[#allocation2 + $0x88] sm:$0xff] %v587
    %620 = vst [vmem:[#allocation2 + $0x90] sm:$0xff] %v588
    %621 = vst [vmem:[#allocation2 + $0x98] sm:$0xff] %v589
    %622 = vst [vmem:[#allocation2 + $0xa0] sm:$0xff] %v590
    %623 = vst [vmem:[#allocation2 + $0xa8] sm:$0xff] %v591
    %624 = vst [vmem:[#allocation2 + $0xb0] sm:$0xff] %v592
    %625 = vst [vmem:[#allocation2 + $0xb8] sm:$0xff] %v593
    %626 = vst [vmem:[#allocation2 + $0xc0] sm:$0xff] %v594
    %627 = vst [vmem:[#allocation2 + $0xc8] sm:$0xff] %v595
    %628 = vst [vmem:[#allocation2 + $0xd0] sm:$0xff] %v596
    %629 = vst [vmem:[#allocation2 + $0xd8] sm:$0xff] %v597
    %630 = vst [vmem:[#allocation2 + $0xe0] sm:$0xff] %v598
    %631 = vst [vmem:[#allocation2 + $0xe8] sm:$0xff] %v599
    %632 = vst [vmem:[#allocation2 + $0xf0] sm:$0xff] %v600
    %633 = vst [vmem:[#allocation2 + $0xf8] sm:$0xff] %v601
    // Predicated region
    $region18: #{_encode_padded.1} parent=1 // pred_check
      %p634 = pneg %p16
    $region19: #{_encode_padded.1} parent=1 // pred_check_branch
      %636 = sbr.rel (%p634) target = $region21
    $region20: #{_encode_padded.1} parent=1 // pred_region
      %v637 = vld [vmem:[#allocation2] sm:$0xff]
      %v638 = vld [vmem:[#allocation2 + $0x8] sm:$0xff]
      %v639 = vld [vmem:[#allocation2 + $0x10] sm:$0xff]
      %v640 = vld [vmem:[#allocation2 + $0x18] sm:$0xff]
      %v641 = vld [vmem:[#allocation2 + $0x20] sm:$0xff]
      %v642 = vld [vmem:[#allocation2 + $0x28] sm:$0xff]
      %v643 = vld [vmem:[#allocation2 + $0x30] sm:$0xff]
      %v644 = vld [vmem:[#allocation2 + $0x38] sm:$0xff]
      %v645 = vld [vmem:[#allocation2 + $0x40] sm:$0xff]
      %v646 = vld [vmem:[#allocation2 + $0x48] sm:$0xff]
      %v647 = vld [vmem:[#allocation2 + $0x50] sm:$0xff]
      %v648 = vld [vmem:[#allocation2 + $0x58] sm:$0xff]
      %v649 = vld [vmem:[#allocation2 + $0x60] sm:$0xff]
      %v650 = vld [vmem:[#allocation2 + $0x68] sm:$0xff]
      %v651 = vld [vmem:[#allocation2 + $0x70] sm:$0xff]
      %v652 = vld [vmem:[#allocation2 + $0x78] sm:$0xff]
      %v653 = vld [vmem:[#allocation2 + $0x80] sm:$0xff]
      %v654 = vld [vmem:[#allocation2 + $0x88] sm:$0xff]
      %v655 = vld [vmem:[#allocation2 + $0x90] sm:$0xff]
      %v656 = vld [vmem:[#allocation2 + $0x98] sm:$0xff]
      %v657 = vld [vmem:[#allocation2 + $0xa0] sm:$0xff]
      %v658 = vld [vmem:[#allocation2 + $0xa8] sm:$0xff]
      %v659 = vld [vmem:[#allocation2 + $0xb0] sm:$0xff]
      %v660 = vld [vmem:[#allocation2 + $0xb8] sm:$0xff]
      %v661 = vld [vmem:[#allocation2 + $0xc0] sm:$0xff]
      %v662 = vld [vmem:[#allocation2 + $0xc8] sm:$0xff]
      %v663 = vld [vmem:[#allocation2 + $0xd0] sm:$0xff]
      %v664 = vld [vmem:[#allocation2 + $0xd8] sm:$0xff]
      %v665 = vld [vmem:[#allocation2 + $0xe0] sm:$0xff]
      %v666 = vld [vmem:[#allocation2 + $0xe8] sm:$0xff]
      %v667 = vld [vmem:[#allocation2 + $0xf0] sm:$0xff]
      %v668 = vld [vmem:[#allocation2 + $0xf8] sm:$0xff]
      %v669 = vld [vmem:[%s2] sm:$0x1]
      %v671 = vlaneseq
      %v672 = vshrl.u32 %v671, 7
      %v673 = vsub.s32 0, %v672
      %v674 = vrot.slane %v669, %v673
      %v676 = vadd.f32 %v637, %v674
      %v677 = vadd.f32 %v638, %v674
      %v678 = vadd.f32 %v639, %v674
      %v679 = vadd.f32 %v640, %v674
      %v680 = vadd.f32 %v641, %v674
      %v681 = vadd.f32 %v642, %v674
      %v682 = vadd.f32 %v643, %v674
      %v683 = vadd.f32 %v644, %v674
      %v684 = vadd.f32 %v645, %v674
      %v685 = vadd.f32 %v646, %v674
      %v686 = vadd.f32 %v647, %v674
      %v687 = vadd.f32 %v648, %v674
      %v688 = vadd.f32 %v649, %v674
      %v689 = vadd.f32 %v650, %v674
      %v690 = vadd.f32 %v651, %v674
      %v691 = vadd.f32 %v652, %v674
      %v692 = vadd.f32 %v653, %v674
      %v693 = vadd.f32 %v654, %v674
      %v694 = vadd.f32 %v655, %v674
      %v695 = vadd.f32 %v656, %v674
      %v696 = vadd.f32 %v657, %v674
      %v697 = vadd.f32 %v658, %v674
      %v698 = vadd.f32 %v659, %v674
      %v699 = vadd.f32 %v660, %v674
      %v700 = vadd.f32 %v661, %v674
      %v701 = vadd.f32 %v662, %v674
      %v702 = vadd.f32 %v663, %v674
      %v703 = vadd.f32 %v664, %v674
      %v704 = vadd.f32 %v665, %v674
      %v705 = vadd.f32 %v666, %v674
      %v706 = vadd.f32 %v667, %v674
      %v707 = vadd.f32 %v668, %v674
      %v708 = vmax.f32 %v676, 0.0
      %v709 = vmax.f32 %v677, 0.0
      %v710 = vmax.f32 %v678, 0.0
      %v711 = vmax.f32 %v679, 0.0
      %v712 = vmax.f32 %v680, 0.0
      %v713 = vmax.f32 %v681, 0.0
      %v714 = vmax.f32 %v682, 0.0
      %v715 = vmax.f32 %v683, 0.0
      %v716 = vmax.f32 %v684, 0.0
      %v717 = vmax.f32 %v685, 0.0
      %v718 = vmax.f32 %v686, 0.0
      %v719 = vmax.f32 %v687, 0.0
      %v720 = vmax.f32 %v688, 0.0
      %v721 = vmax.f32 %v689, 0.0
      %v722 = vmax.f32 %v690, 0.0
      %v723 = vmax.f32 %v691, 0.0
      %v724 = vmax.f32 %v692, 0.0
      %v725 = vmax.f32 %v693, 0.0
      %v726 = vmax.f32 %v694, 0.0
      %v727 = vmax.f32 %v695, 0.0
      %v728 = vmax.f32 %v696, 0.0
      %v729 = vmax.f32 %v697, 0.0
      %v730 = vmax.f32 %v698, 0.0
      %v731 = vmax.f32 %v699, 0.0
      %v732 = vmax.f32 %v700, 0.0
      %v733 = vmax.f32 %v701, 0.0
      %v734 = vmax.f32 %v702, 0.0
      %v735 = vmax.f32 %v703, 0.0
      %v736 = vmax.f32 %v704, 0.0
      %v737 = vmax.f32 %v705, 0.0
      %v738 = vmax.f32 %v706, 0.0
      %v739 = vmax.f32 %v707, 0.0
      %v740 = vpack.c.bf16 %v709, %v708
      %v741 = vpack.c.bf16 %v711, %v710
      %v742 = vpack.c.bf16 %v713, %v712
      %v743 = vpack.c.bf16 %v715, %v714
      %v744 = vpack.c.bf16 %v717, %v716
      %v745 = vpack.c.bf16 %v719, %v718
      %v746 = vpack.c.bf16 %v721, %v720
      %v747 = vpack.c.bf16 %v723, %v722
      %v748 = vpack.c.bf16 %v725, %v724
      %v749 = vpack.c.bf16 %v727, %v726
      %v750 = vpack.c.bf16 %v729, %v728
      %v751 = vpack.c.bf16 %v731, %v730
      %v752 = vpack.c.bf16 %v733, %v732
      %v753 = vpack.c.bf16 %v735, %v734
      %v754 = vpack.c.bf16 %v737, %v736
      %v755 = vpack.c.bf16 %v739, %v738
      %v772 = vunpack.c.l.b16 %v740
      %v773 = vunpack.c.h.b16 %v740
      %v774 = vunpack.c.l.b16 %v741
      %v775 = vunpack.c.h.b16 %v741
      %v776 = vunpack.c.l.b16 %v742
      %v777 = vunpack.c.h.b16 %v742
      %v778 = vunpack.c.l.b16 %v743
      %v779 = vunpack.c.h.b16 %v743
      %v780 = vunpack.c.l.b16 %v744
      %v781 = vunpack.c.h.b16 %v744
      %v782 = vunpack.c.l.b16 %v745
      %v783 = vunpack.c.h.b16 %v745
      %v784 = vunpack.c.l.b16 %v746
      %v785 = vunpack.c.h.b16 %v746
      %v786 = vunpack.c.l.b16 %v747
      %v787 = vunpack.c.h.b16 %v747
      %v788 = vunpack.c.l.b16 %v748
      %v789 = vunpack.c.h.b16 %v748
      %v790 = vunpack.c.l.b16 %v749
      %v791 = vunpack.c.h.b16 %v749
      %v792 = vunpack.c.l.b16 %v750
      %v793 = vunpack.c.h.b16 %v750
      %v794 = vunpack.c.l.b16 %v751
      %v795 = vunpack.c.h.b16 %v751
      %v796 = vunpack.c.l.b16 %v752
      %v797 = vunpack.c.h.b16 %v752
      %v798 = vunpack.c.l.b16 %v753
      %v799 = vunpack.c.h.b16 %v753
      %v800 = vunpack.c.l.b16 %v754
      %v801 = vunpack.c.h.b16 %v754
      %v802 = vunpack.c.l.b16 %v755
      %v803 = vunpack.c.h.b16 %v755
      %v804 = vpack.c.b16 %v772, %v772
      %v805 = vpack.c.b16 %v773, %v773
      %v806 = vpack.c.b16 %v774, %v774
      %v807 = vpack.c.b16 %v775, %v775
      %v808 = vpack.c.b16 %v776, %v776
      %v809 = vpack.c.b16 %v777, %v777
      %v810 = vpack.c.b16 %v778, %v778
      %v811 = vpack.c.b16 %v779, %v779
      %v812 = vpack.c.b16 %v780, %v780
      %v813 = vpack.c.b16 %v781, %v781
      %v814 = vpack.c.b16 %v782, %v782
      %v815 = vpack.c.b16 %v783, %v783
      %v816 = vpack.c.b16 %v784, %v784
      %v817 = vpack.c.b16 %v785, %v785
      %v818 = vpack.c.b16 %v786, %v786
      %v819 = vpack.c.b16 %v787, %v787
      %v820 = vpack.c.b16 %v788, %v788
      %v821 = vpack.c.b16 %v789, %v789
      %v822 = vpack.c.b16 %v790, %v790
      %v823 = vpack.c.b16 %v791, %v791
      %v824 = vpack.c.b16 %v792, %v792
      %v825 = vpack.c.b16 %v793, %v793
      %v826 = vpack.c.b16 %v794, %v794
      %v827 = vpack.c.b16 %v795, %v795
      %v828 = vpack.c.b16 %v796, %v796
      %v829 = vpack.c.b16 %v797, %v797
      %v830 = vpack.c.b16 %v798, %v798
      %v831 = vpack.c.b16 %v799, %v799
      %v832 = vpack.c.b16 %v800, %v800
      %v833 = vpack.c.b16 %v801, %v801
      %v834 = vpack.c.b16 %v802, %v802
      %v835 = vpack.c.b16 %v803, %v803
      %868 = vst [vmem:[#allocation3] sm:$0xf] %v804
      %869 = vst [vmem:[#allocation3 + $0x4] sm:$0xf] %v805
      %870 = vst [vmem:[#allocation3 + $0x8] sm:$0xf] %v806
      %871 = vst [vmem:[#allocation3 + $0xc] sm:$0xf] %v807
      %872 = vst [vmem:[#allocation3 + $0x10] sm:$0xf] %v808
      %873 = vst [vmem:[#allocation3 + $0x14] sm:$0xf] %v809
      %874 = vst [vmem:[#allocation3 + $0x18] sm:$0xf] %v810
      %875 = vst [vmem:[#allocation3 + $0x1c] sm:$0xf] %v811
      %876 = vst [vmem:[#allocation3 + $0x20] sm:$0xf] %v812
      %877 = vst [vmem:[#allocation3 + $0x24] sm:$0xf] %v813
      %878 = vst [vmem:[#allocation3 + $0x28] sm:$0xf] %v814
      %879 = vst [vmem:[#allocation3 + $0x2c] sm:$0xf] %v815
      %880 = vst [vmem:[#allocation3 + $0x30] sm:$0xf] %v816
      %881 = vst [vmem:[#allocation3 + $0x34] sm:$0xf] %v817
      %882 = vst [vmem:[#allocation3 + $0x38] sm:$0xf] %v818
      %883 = vst [vmem:[#allocation3 + $0x3c] sm:$0xf] %v819
      %884 = vst [vmem:[#allocation3 + $0x40] sm:$0xf] %v820
      %885 = vst [vmem:[#allocation3 + $0x44] sm:$0xf] %v821
      %886 = vst [vmem:[#allocation3 + $0x48] sm:$0xf] %v822
      %887 = vst [vmem:[#allocation3 + $0x4c] sm:$0xf] %v823
      %888 = vst [vmem:[#allocation3 + $0x50] sm:$0xf] %v824
      %889 = vst [vmem:[#allocation3 + $0x54] sm:$0xf] %v825
      %890 = vst [vmem:[#allocation3 + $0x58] sm:$0xf] %v826
      %891 = vst [vmem:[#allocation3 + $0x5c] sm:$0xf] %v827
      %892 = vst [vmem:[#allocation3 + $0x60] sm:$0xf] %v828
      %893 = vst [vmem:[#allocation3 + $0x64] sm:$0xf] %v829
      %894 = vst [vmem:[#allocation3 + $0x68] sm:$0xf] %v830
      %895 = vst [vmem:[#allocation3 + $0x6c] sm:$0xf] %v831
      %896 = vst [vmem:[#allocation3 + $0x70] sm:$0xf] %v832
      %897 = vst [vmem:[#allocation3 + $0x74] sm:$0xf] %v833
      %898 = vst [vmem:[#allocation3 + $0x78] sm:$0xf] %v834
      %899 = vst [vmem:[#allocation3 + $0x7c] sm:$0xf] %v835
    $region21: #{_encode_padded.1} parent=1 // pred_fallthru
      _
    // Predicated region
    $region22: #{_encode_padded.1} parent=1 // pred_check
      _
    $region23: #{_encode_padded.1} parent=1 // pred_check_branch
      %901 = sbr.rel (0) target = $region25
    $region24: #{_encode_padded.1} parent=1 // pred_region
      %s903 = ssub.s32 2048, 2048
      %904 = vsyncadd [#allocation4], %s903
      %s905 = sshll.u32 [#allocation3], 4
      %s906 = int_to_ptr.vmem [resolvable:$true] %s905
      %911 = dma.vmem_to_hbm [thread:$0]  %s906, 2048, %s3, [#allocation4], 64, 64, 4
    $region25: #{_encode_padded.1} parent=1 // pred_fallthru
      _
    // Predicated region
    $region26: #{_encode_padded.1} parent=1 // pred_check
      _
    $region27: #{_encode_padded.1} parent=1 // pred_check_branch
      %913 = sbr.rel (0) target = $region29
    $region28: #{_encode_padded.1} parent=1 // pred_region
      %914 = dma.done [#allocation4], 2048
    $region29: #{_encode_padded.1} parent=1 // pred_fallthru
      _
    %915 = vsyncpa [#allocation4], 1

</llo_original>
